<compile_context>
chip_gen: v7x
topology: tpu7x:2x2x1
jax: 0.10.0
libtpu: 0.0.40
codegen_flags: <defaults>
</compile_context>

<pallas_src>
import jax
import jax.numpy as jnp
from jax.experimental import pallas as pl
from jax.experimental.pallas import tpu as pltpu

_TARGET_BLOCK_BYTES = 4 << 20   # ~4 MiB per f32 input block (2-8 MiB sweet spot)
_MIN_BLOCK_BYTES = 1 << 20      # don't shrink below this when balancing grid
_CHUNK = 32                     # sublane rows per in-kernel chunk (int8 tile)


def _round_up(a, b):
    return -(-a // b) * b


def _round_down(a, b):
    return (a // b) * b


def _pick_block_rows(C, S):
    """Rows (of 128 lanes each) per grid block."""
    if S <= _CHUNK:
        return S                               # whole spatial axis, one block
    row_bytes = 4 * C * 128                    # one f32 sublane row across C
    ts = max(_CHUNK, _round_down(_TARGET_BLOCK_BYTES // row_bytes, _CHUNK))
    # Prefer >= ~8 grid steps (v7x megacore load balance) as long as blocks
    # stay well above the per-step-overhead regime.
    ts_bal = max(_CHUNK, _round_up(pl.cdiv(S, 8), _CHUNK))
    if ts > ts_bal and ts_bal * row_bytes >= _MIN_BLOCK_BYTES:
        ts = ts_bal
    return min(ts, max(_CHUNK, _round_down(S, _CHUNK)))


def _argmax_int8_kernel(x_ref, o_ref):
    # x_ref: (C, TS, 128) f32 block in VMEM; o_ref: (TS, 128) int8 block.
    C, TS, _ = x_ref.shape
    # Wrapper guarantees: TS <= 32 (equal to full spatial dim) or TS % 32 == 0.
    chunk = TS if TS <= _CHUNK else _CHUNK
    n_chunks = TS // chunk
    unroll = True if C <= 16 else 4

    def scan_chunk(r0):
        bv = x_ref[0, pl.ds(r0, chunk), :]                 # (chunk, 128) f32
        bi = jnp.zeros(bv.shape, dtype=jnp.int32)

        def chan_step(c, carry):
            cbv, cbi = carry
            v = x_ref[c, pl.ds(r0, chunk), :]
            # Strict '>' keeps the FIRST max on ties; NaN treated as maximal
            # (first NaN wins) -- matches torch.max / jnp.argmax semantics.
            take = (v > cbv) | (jnp.isnan(v) & ~jnp.isnan(cbv))
            return jnp.where(take, v, cbv), jnp.where(take, c, cbi)

        bv, bi = jax.lax.fori_loop(1, C, chan_step, (bv, bi), unroll=unroll)
        # Literal `.to(torch.int8)`: wraps for argmax indices >= 128 (as torch).
        o_ref[pl.ds(r0, chunk), :] = bi.astype(jnp.int8)

    if n_chunks == 1:
        scan_chunk(0)
    else:
        @pl.loop(0, n_chunks)
        def _(j):
            scan_chunk(pl.multiple_of(j * chunk, chunk))


def return_int8_argmax(x):
    """x: (1, C, H, W) float array -> (H, W) int8 argmax over the C axis."""
    x0 = jnp.squeeze(x, axis=0)                 # glue: x.squeeze(0)
    C, H, W = x0.shape
    L = H * W

    L128 = _round_up(L, 128)
    x_flat = x0.reshape(C, L)                   # metadata-only reshape
    if L128 != L:
        # Only taken when H*W is not a multiple of 128 (costs one extra HBM
        # pass); padded lanes feed output lanes that are sliced off below.
        # TODO(synk): handle the ragged lane tail without materializing a pad.
        x_flat = jnp.pad(x_flat, ((0, 0), (0, L128 - L)))
    S = L128 // 128
    x3 = x_flat.reshape(C, S, 128)              # metadata-only reshape (no copy)

    ts = _pick_block_rows(C, S)
    grid = (pl.cdiv(S, ts),)

    in_block_bytes = 4 * C * ts * 128
    out_block_bytes = ts * 128
    # Double-buffered in + out blocks plus slack; floor of 32 MiB clears the
    # v5e 16 MiB scoped default while staying under v7x's 64 MiB physical VMEM
    # for any realistic C (int8-meaningful C <= 127 -> ~4 MiB input blocks).
    vmem_limit = max(32 << 20, 2 * (in_block_bytes + out_block_bytes) + (2 << 20))

    out2d = pl.pallas_call(
        _argmax_int8_kernel,
        out_shape=jax.ShapeDtypeStruct((S, 128), jnp.int8),
        grid=grid,
        in_specs=[pl.BlockSpec((C, ts, 128), lambda i: (0, i, 0))],
        out_specs=pl.BlockSpec((ts, 128), lambda i: (i, 0)),
        compiler_params=pltpu.CompilerParams(
            # Independent spatial blocks -> shard grid steps across the two
            # TensorCores on v7x megacore.
            dimension_semantics=("parallel",),
            vmem_limit_bytes=vmem_limit,
        ),
    )(x3)

    return out2d.reshape(L128)[:L].reshape(H, W)


if __name__ == "__main__":
    key = jax.random.PRNGKey(0)

    def ref_fn(x):
        return jnp.argmax(jnp.squeeze(x, axis=0), axis=0).astype(jnp.int8)

    # Leading dim must be 1 to mirror x.squeeze(0) in the torch module.
    shapes = [
        (1, 4, 16, 16),    # S=2  -> single full-dim block, fully unrolled C
        (1, 20, 48, 80),   # S=30 -> one ~300 KiB block (was 8 tiny steps)
        (1, 100, 8, 16),   # S=1  -> large-C path (fori_loop, unroll=4)
        (1, 6, 128, 96),   # S=96 -> chunked scan: 3 x 32-row chunks via pl.loop
        (1, 5, 10, 10),    # L=100 -> ragged lane tail (pad fallback path)
    ]
    for shape in shapes:
        key, sub = jax.random.split(key)
        x = jax.random.normal(sub, shape, dtype=jnp.float32)
        out = jax.block_until_ready(return_int8_argmax(x))
        ref = ref_fn(x)
        assert out.dtype == jnp.int8, (out.dtype, shape)
        assert out.shape == ref.shape, (out.shape, ref.shape, shape)
        assert bool(jnp.all(out == ref)), f"mismatch for shape {shape}"

    print("KERNEL_OK")
</pallas_src>

<mosaic_0001>
module attributes {stable_mosaic.version = 11 : i64} {
  func.func @_argmax_int8_kernel(%arg0: i32, %arg1: memref<4x2x128xf32, #tpu.memory_space<vmem>>, %arg2: memref<2x128xi8, #tpu.memory_space<vmem>>) attributes {dimension_semantics = [#tpu.dimension_semantics<parallel>], iteration_bounds = array<i64: 1>, scalar_prefetch = 0 : i64, scratch_operands = 0 : i64, tpu.core_type = #tpu.core_type<tc>, window_params = [{transform_indices = @transform_0, window_bounds = array<i64: 4, 2, 128>}, {transform_indices = @transform_1, window_bounds = array<i64: 2, 128>}]} {
    %c0 = arith.constant 0 : index
    %c0_0 = arith.constant 0 : index
    %c0_1 = arith.constant 0 : index
    %0 = vector.load %arg1[%c0, %c0_0, %c0_1] : memref<4x2x128xf32, #tpu.memory_space<vmem>>, vector<1x2x128xf32>
    %1 = vector.shape_cast %0 : vector<1x2x128xf32> to vector<2x128xf32>
    %c0_i32 = arith.constant 0 : i32
    %2 = vector.broadcast %c0_i32 : i32 to vector<2x128xi32>
    %c1_i32 = arith.constant 1 : i32
    %3 = arith.index_cast %c1_i32 : i32 to index
    %c0_2 = arith.constant 0 : index
    %c0_3 = arith.constant 0 : index
    %4 = vector.load %arg1[%3, %c0_2, %c0_3] : memref<4x2x128xf32, #tpu.memory_space<vmem>>, vector<1x2x128xf32>
    %5 = vector.shape_cast %4 : vector<1x2x128xf32> to vector<2x128xf32>
    %6 = arith.cmpf ogt, %5, %1 : vector<2x128xf32>
    %7 = arith.cmpf one, %5, %5 : vector<2x128xf32>
    %8 = arith.cmpf one, %1, %1 : vector<2x128xf32>
    %cst = arith.constant dense<true> : vector<2x128xi1>
    %9 = arith.xori %8, %cst : vector<2x128xi1>
    %10 = arith.andi %7, %9 : vector<2x128xi1>
    %11 = arith.ori %6, %10 : vector<2x128xi1>
    %12 = arith.select %11, %5, %1 : vector<2x128xi1>, vector<2x128xf32>
    %13 = vector.broadcast %c1_i32 : i32 to vector<2x128xi32>
    %14 = arith.select %11, %13, %2 : vector<2x128xi1>, vector<2x128xi32>
    %c2_i32 = arith.constant 2 : i32
    %15 = arith.index_cast %c2_i32 : i32 to index
    %c0_4 = arith.constant 0 : index
    %c0_5 = arith.constant 0 : index
    %16 = vector.load %arg1[%15, %c0_4, %c0_5] : memref<4x2x128xf32, #tpu.memory_space<vmem>>, vector<1x2x128xf32>
    %17 = vector.shape_cast %16 : vector<1x2x128xf32> to vector<2x128xf32>
    %18 = arith.cmpf ogt, %17, %12 : vector<2x128xf32>
    %19 = arith.cmpf one, %17, %17 : vector<2x128xf32>
    %20 = arith.cmpf one, %12, %12 : vector<2x128xf32>
    %cst_6 = arith.constant dense<true> : vector<2x128xi1>
    %21 = arith.xori %20, %cst_6 : vector<2x128xi1>
    %22 = arith.andi %19, %21 : vector<2x128xi1>
    %23 = arith.ori %18, %22 : vector<2x128xi1>
    %24 = arith.select %23, %17, %12 : vector<2x128xi1>, vector<2x128xf32>
    %25 = vector.broadcast %c2_i32 : i32 to vector<2x128xi32>
    %26 = arith.select %23, %25, %14 : vector<2x128xi1>, vector<2x128xi32>
    %c3_i32 = arith.constant 3 : i32
    %27 = arith.index_cast %c3_i32 : i32 to index
    %c0_7 = arith.constant 0 : index
    %c0_8 = arith.constant 0 : index
    %28 = vector.load %arg1[%27, %c0_7, %c0_8] : memref<4x2x128xf32, #tpu.memory_space<vmem>>, vector<1x2x128xf32>
    %29 = vector.shape_cast %28 : vector<1x2x128xf32> to vector<2x128xf32>
    %30 = arith.cmpf ogt, %29, %24 : vector<2x128xf32>
    %31 = arith.cmpf one, %29, %29 : vector<2x128xf32>
    %32 = arith.cmpf one, %24, %24 : vector<2x128xf32>
    %cst_9 = arith.constant dense<true> : vector<2x128xi1>
    %33 = arith.xori %32, %cst_9 : vector<2x128xi1>
    %34 = arith.andi %31, %33 : vector<2x128xi1>
    %35 = arith.ori %30, %34 : vector<2x128xi1>
    %36 = arith.select %35, %29, %24 : vector<2x128xi1>, vector<2x128xf32>
    %37 = vector.broadcast %c3_i32 : i32 to vector<2x128xi32>
    %38 = arith.select %35, %37, %26 : vector<2x128xi1>, vector<2x128xi32>
    %c3_i32_10 = arith.constant 3 : i32
    %39 = arith.trunci %38 : vector<2x128xi32> to vector<2x128xi8>
    %c0_11 = arith.constant 0 : index
    %c0_12 = arith.constant 0 : index
    %40 = vector.load %arg2[%c0_11, %c0_12] : memref<2x128xi8, #tpu.memory_space<vmem>>, vector<2x128xi8>
    tpu.vector_store %arg2[%c0_11, %c0_12], %39 {strides = array<i32>} : memref<2x128xi8, #tpu.memory_space<vmem>>, vector<2x128xi8>,
    return
  }
  func.func @transform_0(%arg0: i32) -> (i32, i32, i32) {
    %c0_i32 = arith.constant 0 : i32
    %c0_i32_0 = arith.constant 0 : i32
    %c0_i32_1 = arith.constant 0 : i32
    return %c0_i32, %arg0, %c0_i32_0 : i32, i32, i32
  }
  func.func @transform_1(%arg0: i32) -> (i32, i32) {
    %c0_i32 = arith.constant 0 : i32
    %c0_i32_0 = arith.constant 0 : i32
    return %arg0, %c0_i32 : i32, i32
  }
}

</mosaic_0001>

<llo_original>
// kernel: tpu_custom_call.1
$region0: #{tpu_custom_call.1}
  #allocation0 [shape = 'u32[]', space=smem, size = 0x4, offset = 0x4, fixed_abs, tag = 'smem constant byte address 0x4 - core index']
  #allocation1 [shape = 'u32[144,128]{1,0:T(1,128)}', space=vmem, size = 0x12000, scoped, tag = 'internal scratch']
  %s0 = inlined_call_operand.hbm [shape: f32[4,2,128], index: 0, kind: input, shape index: {}]
  %s1 = inlined_call_operand.hbm [shape: s8[2,128], index: 1, kind: output, shape index: {}]
  %s2 = sld [smem:[#allocation0]]
  $region18: #{tpu_custom_call.1} parent=0
    _
  %s4 = ssub.s32 1, %s2
  %s5 = scalar_select 0, %s4, %s2
  $region1: #{tpu_custom_call.1} parent=0
    #allocation2 [shape = 'u8[4096]{0}', space=vmem, size = 0x1000, scoped, tag = 'input window, operand 0, single buffered']
    #allocation3 [shape = 's32[1]{0}', space=sflag, size = 0x4, scoped, tag = 'scoped memory for tpu_custom_call.1']
    #allocation4 [shape = 's32[1]{0}', space=sflag, size = 0x4, scoped, tag = 'scoped memory for tpu_custom_call.1']
    #allocation5 [shape = 'u8[512]{0}', space=vmem, size = 0x400, scoped, tag = 'output window, operand 0, single buffered']
    %6 = vsyncpa [#allocation3], 0
    %7 = vsyncpa [#allocation4], 0
    // Predicated region
    $region2: #{tpu_custom_call.1} parent=1 // pred_check
      _
    $region3: #{tpu_custom_call.1} parent=1 // pred_check_branch
      %9 = sbr.rel (0) target = $region5
    $region4: #{tpu_custom_call.1} parent=1 // pred_region
      %s11 = ssub.s32 128, 128
      %12 = vsyncadd [#allocation3], %s11
      %s13 = sshll.u32 [#allocation2], 4
      %s14 = int_to_ptr.vmem [resolvable:$true] %s13
      %19 = dma.hbm_to_vmem [thread:$0]  %s0, 128, %s14, [#allocation3], 32, 32, 2
    $region5: #{tpu_custom_call.1} parent=1 // pred_fallthru
      _
    // Predicated region
    $region6: #{tpu_custom_call.1} parent=1 // pred_check
      _
    $region7: #{tpu_custom_call.1} parent=1 // pred_check_branch
      %21 = sbr.rel (0) target = $region9
    $region8: #{tpu_custom_call.1} parent=1 // pred_region
      %22 = dma.done [#allocation3], 128
    $region9: #{tpu_custom_call.1} parent=1 // pred_fallthru
      _
    %v23 = vld [vmem:[#allocation2] sm:$0x3]
    %s24 = scalar_lea.vmem [#allocation2], 2
    %v25 = vld [vmem:[%s24] sm:$0x3]
    %vm26 = vcmp.gt.f32.partialorder %v25, %v23
    %vm27 = vcmp.ne.f32.partialorder %v25, %v25
    %vm28 = vcmp.ne.f32.partialorder %v23, %v23
    %vm29 = vmxor %vm28, 1
    %vm30 = vmand %vm27, %vm29
    %vm31 = vmor %vm26, %vm30
    %v32 = vsel %vm31, %v25, %v23
    %v33 = vsel %vm31, 1, 0
    %s34 = scalar_lea.vmem [#allocation2], 4
    %v35 = vld [vmem:[%s34] sm:$0x3]
    %vm36 = vcmp.gt.f32.partialorder %v35, %v32
    %vm37 = vcmp.ne.f32.partialorder %v35, %v35
    %vm38 = vcmp.ne.f32.partialorder %v32, %v32
    %vm39 = vmxor %vm38, 1
    %vm40 = vmand %vm37, %vm39
    %vm41 = vmor %vm36, %vm40
    %v42 = vsel %vm41, %v35, %v32
    %v43 = vsel %vm41, 2, %v33
    %s44 = scalar_lea.vmem [#allocation2], 6
    %v45 = vld [vmem:[%s44] sm:$0x3]
    %vm46 = vcmp.gt.f32.partialorder %v45, %v42
    %vm47 = vcmp.ne.f32.partialorder %v45, %v45
    %vm48 = vcmp.ne.f32.partialorder %v42, %v42
    %vm49 = vmxor %vm48, 1
    %vm50 = vmand %vm47, %vm49
    %vm51 = vmor %vm46, %vm50
    %v52 = vsel %vm51, 3, %v43
    %v53 = vpack.c.b16 %v52, %v52
    %v54 = vpack.c.b8 %v53, %v53
    %vm55 = vcmask 1040384
    %vm56 = vsmask.f32 256
    %vm57 = vmand %vm55, %vm56
    %v58 = vld [vmem:[#allocation5] sm:$0x1]
    %v59 = vsel %vm57, %v54, %v58
    %60 = vst [vmem:[#allocation5] sm:$0x1] %v59
    // Predicated region
    $region10: #{tpu_custom_call.1} parent=1 // pred_check
      _
    $region11: #{tpu_custom_call.1} parent=1 // pred_check_branch
      %62 = sbr.rel (0) target = $region13
    $region12: #{tpu_custom_call.1} parent=1 // pred_region
      %s64 = ssub.s32 16, 16
      %65 = vsyncadd [#allocation4], %s64
      %s67 = sshll.u32 [#allocation5], 4
      %s68 = int_to_ptr.vmem [resolvable:$true] %s67
      %70 = dma.vmem_to_hbm [thread:$0]  %s68, 16, %s1, [#allocation4]
    $region13: #{tpu_custom_call.1} parent=1 // pred_fallthru
      _
    // Predicated region
    $region14: #{tpu_custom_call.1} parent=1 // pred_check
      _
    $region15: #{tpu_custom_call.1} parent=1 // pred_check_branch
      %72 = sbr.rel (0) target = $region17
    $region16: #{tpu_custom_call.1} parent=1 // pred_region
      %73 = dma.done [#allocation4], 16
    $region17: #{tpu_custom_call.1} parent=1 // pred_fallthru
      _
    %74 = vsyncpa [#allocation3], 1
    %75 = vsyncpa [#allocation4], 1

</llo_original>
